<compile_context>
chip_gen: v5e
topology: v5e:2x2
jax: 0.10.0
libtpu: 0.0.40
codegen_flags: <defaults>
</compile_context>

<pallas_src>
import functools

import jax
import jax.numpy as jnp
from jax.experimental import pallas as pl
from jax.experimental.pallas import tpu as pltpu

BN_EPS = 1e-5


def _sum_per_channel(v):
    """(N, C, X, Y) -> (1, C, 1, 1) via chained single-axis reductions."""
    v = jnp.sum(v, axis=3, keepdims=True)
    v = jnp.sum(v, axis=2, keepdims=True)
    return jnp.sum(v, axis=0, keepdims=True)


def _avgpool_bn_kernel(x_ref, gamma_ref, beta_ref, out_ref, *,
                       K, S, P, H, W, HOUT, WOUT):
    # x_ref:     (N, C, H, W)       the whole input, one grid step
    # gamma_ref: (1, C, 1, 1)       BN affine scale
    # beta_ref:  (1, C, 1, 1)       BN affine shift
    # out_ref:   (N, C, HOUT, WOUT)
    xf = x_ref[...].astype(jnp.float32)

    def window_sum(v, axis, in_len, out_len):
        """Sum the K pooling taps along `axis` (-1 or -2).

        The zero-padding border is folded into the operator: each tap is a
        cyclic roll of the unpadded value, strided-sliced to the output
        positions, with wrapped-around (out-of-bounds) entries zeroed by an
        iota mask.  Nothing is materialized in VMEM/HBM.
        """
        dim = v.ndim + axis
        acc = None
        for t in range(K):
            off = t - P  # tap offset relative to the window start (padded coords)
            if off == 0:
                term = v
            else:
                term = pltpu.roll(v, shift=(-off) % in_len, axis=dim)
            limits = list(term.shape)
            limits[dim] = S * (out_len - 1) + 1
            strides = [1] * term.ndim
            strides[dim] = S
            term = jax.lax.slice(term, (0,) * term.ndim, tuple(limits),
                                 tuple(strides))
            # Static check: does this tap ever read outside [0, in_len)?
            if off < 0 or S * (out_len - 1) + off >= in_len:
                idx = jax.lax.broadcasted_iota(jnp.int32, term.shape, dim)
                src = idx * S + off
                term = jnp.where((src >= 0) & (src < in_len), term, 0.0)
            acc = term if acc is None else acc + term
        return acc

    # Separable pooling: K taps along W, then K taps along H (f32 VPU adds).
    rowsum = window_sum(xf, axis=-1, in_len=W, out_len=WOUT)     # (N, C, H, WOUT)
    winsum = window_sum(rowsum, axis=-2, in_len=H, out_len=HOUT)  # (N, C, HOUT, WOUT)

    # count_include_pad=False divisor, rebuilt in-kernel (no HBM input).
    oh = jax.lax.broadcasted_iota(jnp.int32, (HOUT, WOUT), 0)
    ow = jax.lax.broadcasted_iota(jnp.int32, (HOUT, WOUT), 1)
    vh = jnp.minimum(oh * S - P + K, H) - jnp.maximum(oh * S - P, 0)
    vw = jnp.minimum(ow * S - P + K, W) - jnp.maximum(ow * S - P, 0)
    pooled = winsum * (1.0 / (vh * vw).astype(jnp.float32))       # (N, C, HOUT, WOUT)

    # BatchNorm2d, training-mode batch statistics (biased variance), two-pass.
    inv_m = 1.0 / float(pooled.shape[0] * HOUT * WOUT)
    mean = _sum_per_channel(pooled) * inv_m                       # (1, C, 1, 1)
    centered = pooled - mean
    var = _sum_per_channel(centered * centered) * inv_m           # (1, C, 1, 1)
    scale = jax.lax.rsqrt(var + BN_EPS) * gamma_ref[...]          # (1, C, 1, 1)
    out_ref[...] = (centered * scale + beta_ref[...]).astype(out_ref.dtype)


def avgpool_bn(x, gamma, beta, *, kernel_size, stride, padding):
    """Fused AvgPool2d(count_include_pad=False) + BatchNorm2d, NCHW layout."""
    N, C, H, W = x.shape
    K, S, P = kernel_size, stride, padding
    HOUT = (H + 2 * P - K) // S + 1
    WOUT = (W + 2 * P - K) // S + 1
    if S * (HOUT - 1) + 1 > H or S * (WOUT - 1) + 1 > W:
        raise ValueError(
            "padding too large for in-register border folding "
            "(requires the last window start to lie inside the unpadded plane)")

    gamma4 = gamma.astype(jnp.float32).reshape(1, C, 1, 1)
    beta4 = beta.astype(jnp.float32).reshape(1, C, 1, 1)

    kernel = functools.partial(
        _avgpool_bn_kernel, K=K, S=S, P=P, H=H, W=W, HOUT=HOUT, WOUT=WOUT)

    return pl.pallas_call(
        kernel,
        out_shape=jax.ShapeDtypeStruct((N, C, HOUT, WOUT), x.dtype),
        grid=(1,),
        in_specs=[
            pl.BlockSpec((N, C, H, W), lambda i: (0, 0, 0, 0)),
            pl.BlockSpec((1, C, 1, 1), lambda i: (0, 0, 0, 0)),
            pl.BlockSpec((1, C, 1, 1), lambda i: (0, 0, 0, 0)),
        ],
        out_specs=pl.BlockSpec((N, C, HOUT, WOUT), lambda i: (0, 0, 0, 0)),
        compiler_params=pltpu.CompilerParams(
            dimension_semantics=("arbitrary",),
            vmem_limit_bytes=32 * 1024 * 1024),
    )(x, gamma4, beta4)


def _reference(x, gamma, beta, K, S, P):
    """Pure-JAX reference: AvgPool2d(count_include_pad=False) + BN (batch stats)."""
    N, C, H, W = x.shape
    HOUT = (H + 2 * P - K) // S + 1
    WOUT = (W + 2 * P - K) // S + 1
    xpad = jnp.pad(x.astype(jnp.float32), ((0, 0), (0, 0), (P, P), (P, P)))
    s = jnp.zeros((N, C, HOUT, WOUT), jnp.float32)
    for ki in range(K):
        for kj in range(K):
            s = s + jax.lax.slice(
                xpad, (0, 0, ki, kj),
                (N, C, ki + S * (HOUT - 1) + 1, kj + S * (WOUT - 1) + 1),
                (1, 1, S, S))
    oh = jnp.arange(HOUT)
    ow = jnp.arange(WOUT)
    vh = jnp.minimum(oh * S - P + K, H) - jnp.maximum(oh * S - P, 0)
    vw = jnp.minimum(ow * S - P + K, W) - jnp.maximum(ow * S - P, 0)
    cnt = (vh[:, None] * vw[None, :]).astype(jnp.float32)
    pooled = s / cnt
    mean = pooled.mean(axis=(0, 2, 3), keepdims=True)
    var = ((pooled - mean) ** 2).mean(axis=(0, 2, 3), keepdims=True)
    y = (pooled - mean) * jax.lax.rsqrt(var + BN_EPS)
    return y * gamma[None, :, None, None] + beta[None, :, None, None]


if __name__ == "__main__":
    # Module config: AvgPool(C=4, kernel_size=3, stride=1, padding=1, affine=True)
    N, C, H, W = 2, 4, 16, 16
    K, S, P = 3, 1, 1

    key = jax.random.PRNGKey(0)
    kx, kg, kb = jax.random.split(key, 3)
    x = jax.random.normal(kx, (N, C, H, W), dtype=jnp.float32)
    # Non-trivial affine parameters so the gamma/beta path is exercised
    # (PyTorch default init would be weight=1, bias=0).
    gamma = 1.0 + 0.1 * jax.random.normal(kg, (C,), dtype=jnp.float32)
    beta = 0.1 * jax.random.normal(kb, (C,), dtype=jnp.float32)

    out = avgpool_bn(x, gamma, beta, kernel_size=K, stride=S, padding=P)
    out = jax.block_until_ready(out)

    ref = _reference(x, gamma, beta, K, S, P)
    assert out.shape == ref.shape
    err = float(jnp.max(jnp.abs(out - ref)))
    assert err < 1e-4, f"max abs error vs reference: {err}"
    print("KERNEL_OK")
</pallas_src>

<mosaic_0001>
module attributes {stable_mosaic.version = 11 : i64} {
  func.func @_avgpool_bn_kernel(%arg0: i32, %arg1: memref<2x4x16x16xf32, #tpu.memory_space<vmem>>, %arg2: memref<1x4x1x1xf32, #tpu.memory_space<vmem>>, %arg3: memref<1x4x1x1xf32, #tpu.memory_space<vmem>>, %arg4: memref<2x4x16x16xf32, #tpu.memory_space<vmem>>) attributes {dimension_semantics = [#tpu.dimension_semantics<arbitrary>], iteration_bounds = array<i64: 1>, scalar_prefetch = 0 : i64, scratch_operands = 0 : i64, tpu.core_type = #tpu.core_type<tc>, window_params = [{pipeline_mode = #tpu.pipeline_mode<synchronous>, transform_indices = @transform_0, window_bounds = array<i64: 2, 4, 16, 16>}, {pipeline_mode = #tpu.pipeline_mode<synchronous>, transform_indices = @transform_1, window_bounds = array<i64: 1, 4, 1, 1>}, {pipeline_mode = #tpu.pipeline_mode<synchronous>, transform_indices = @transform_2, window_bounds = array<i64: 1, 4, 1, 1>}, {pipeline_mode = #tpu.pipeline_mode<synchronous>, transform_indices = @transform_3, window_bounds = array<i64: 2, 4, 16, 16>}]} {
    %c0 = arith.constant 0 : index
    %c0_0 = arith.constant 0 : index
    %c0_1 = arith.constant 0 : index
    %c0_2 = arith.constant 0 : index
    %0 = vector.load %arg1[%c0, %c0_0, %c0_1, %c0_2] : memref<2x4x16x16xf32, #tpu.memory_space<vmem>>, vector<2x4x16x16xf32>
    %c1_i32 = arith.constant 1 : i32
    %1 = tpu.dynamic_rotate %0 by %c1_i32 dim 3 : vector<2x4x16x16xf32>, i32 -> vector<2x4x16x16xf32>
    %2 = vector.extract_strided_slice %1 {offsets = [0, 0, 0, 0], sizes = [2, 4, 16, 16], strides = [1, 1, 1, 1]} : vector<2x4x16x16xf32> to vector<2x4x16x16xf32>
    %3 = tpu.iota {dimensions = array<i32: 3>} : vector<2x4x16x16xi32>
    %c1_i32_3 = arith.constant 1 : i32
    %4 = vector.broadcast %c1_i32_3 : i32 to vector<2x4x16x16xi32>
    %5 = arith.muli %3, %4 : vector<2x4x16x16xi32>
    %c-1_i32 = arith.constant -1 : i32
    %6 = vector.broadcast %c-1_i32 : i32 to vector<2x4x16x16xi32>
    %7 = arith.addi %5, %6 : vector<2x4x16x16xi32>
    %c0_i32 = arith.constant 0 : i32
    %8 = vector.broadcast %c0_i32 : i32 to vector<2x4x16x16xi32>
    %9 = arith.cmpi sge, %7, %8 : vector<2x4x16x16xi32>
    %c16_i32 = arith.constant 16 : i32
    %10 = vector.broadcast %c16_i32 : i32 to vector<2x4x16x16xi32>
    %11 = arith.cmpi slt, %7, %10 : vector<2x4x16x16xi32>
    %12 = arith.andi %9, %11 : vector<2x4x16x16xi1>
    %cst = arith.constant 0.000000e+00 : f32
    %13 = vector.broadcast %cst : f32 to vector<2x4x16x16xf32>
    %14 = arith.select %12, %2, %13 : vector<2x4x16x16xi1>, vector<2x4x16x16xf32>
    %15 = vector.extract_strided_slice %0 {offsets = [0, 0, 0, 0], sizes = [2, 4, 16, 16], strides = [1, 1, 1, 1]} : vector<2x4x16x16xf32> to vector<2x4x16x16xf32>
    %16 = arith.addf %14, %15 : vector<2x4x16x16xf32>
    %c15_i32 = arith.constant 15 : i32
    %17 = tpu.dynamic_rotate %0 by %c15_i32 dim 3 : vector<2x4x16x16xf32>, i32 -> vector<2x4x16x16xf32>
    %18 = vector.extract_strided_slice %17 {offsets = [0, 0, 0, 0], sizes = [2, 4, 16, 16], strides = [1, 1, 1, 1]} : vector<2x4x16x16xf32> to vector<2x4x16x16xf32>
    %19 = tpu.iota {dimensions = array<i32: 3>} : vector<2x4x16x16xi32>
    %c1_i32_4 = arith.constant 1 : i32
    %20 = vector.broadcast %c1_i32_4 : i32 to vector<2x4x16x16xi32>
    %21 = arith.muli %19, %20 : vector<2x4x16x16xi32>
    %c1_i32_5 = arith.constant 1 : i32
    %22 = vector.broadcast %c1_i32_5 : i32 to vector<2x4x16x16xi32>
    %23 = arith.addi %21, %22 : vector<2x4x16x16xi32>
    %c0_i32_6 = arith.constant 0 : i32
    %24 = vector.broadcast %c0_i32_6 : i32 to vector<2x4x16x16xi32>
    %25 = arith.cmpi sge, %23, %24 : vector<2x4x16x16xi32>
    %c16_i32_7 = arith.constant 16 : i32
    %26 = vector.broadcast %c16_i32_7 : i32 to vector<2x4x16x16xi32>
    %27 = arith.cmpi slt, %23, %26 : vector<2x4x16x16xi32>
    %28 = arith.andi %25, %27 : vector<2x4x16x16xi1>
    %cst_8 = arith.constant 0.000000e+00 : f32
    %29 = vector.broadcast %cst_8 : f32 to vector<2x4x16x16xf32>
    %30 = arith.select %28, %18, %29 : vector<2x4x16x16xi1>, vector<2x4x16x16xf32>
    %31 = arith.addf %16, %30 : vector<2x4x16x16xf32>
    %c1_i32_9 = arith.constant 1 : i32
    %32 = tpu.dynamic_rotate %31 by %c1_i32_9 dim 2 : vector<2x4x16x16xf32>, i32 -> vector<2x4x16x16xf32>
    %33 = vector.extract_strided_slice %32 {offsets = [0, 0, 0, 0], sizes = [2, 4, 16, 16], strides = [1, 1, 1, 1]} : vector<2x4x16x16xf32> to vector<2x4x16x16xf32>
    %34 = tpu.iota {dimensions = array<i32: 2>} : vector<2x4x16x16xi32>
    %c1_i32_10 = arith.constant 1 : i32
    %35 = vector.broadcast %c1_i32_10 : i32 to vector<2x4x16x16xi32>
    %36 = arith.muli %34, %35 : vector<2x4x16x16xi32>
    %c-1_i32_11 = arith.constant -1 : i32
    %37 = vector.broadcast %c-1_i32_11 : i32 to vector<2x4x16x16xi32>
    %38 = arith.addi %36, %37 : vector<2x4x16x16xi32>
    %c0_i32_12 = arith.constant 0 : i32
    %39 = vector.broadcast %c0_i32_12 : i32 to vector<2x4x16x16xi32>
    %40 = arith.cmpi sge, %38, %39 : vector<2x4x16x16xi32>
    %c16_i32_13 = arith.constant 16 : i32
    %41 = vector.broadcast %c16_i32_13 : i32 to vector<2x4x16x16xi32>
    %42 = arith.cmpi slt, %38, %41 : vector<2x4x16x16xi32>
    %43 = arith.andi %40, %42 : vector<2x4x16x16xi1>
    %cst_14 = arith.constant 0.000000e+00 : f32
    %44 = vector.broadcast %cst_14 : f32 to vector<2x4x16x16xf32>
    %45 = arith.select %43, %33, %44 : vector<2x4x16x16xi1>, vector<2x4x16x16xf32>
    %46 = vector.extract_strided_slice %31 {offsets = [0, 0, 0, 0], sizes = [2, 4, 16, 16], strides = [1, 1, 1, 1]} : vector<2x4x16x16xf32> to vector<2x4x16x16xf32>
    %47 = arith.addf %45, %46 : vector<2x4x16x16xf32>
    %c15_i32_15 = arith.constant 15 : i32
    %48 = tpu.dynamic_rotate %31 by %c15_i32_15 dim 2 : vector<2x4x16x16xf32>, i32 -> vector<2x4x16x16xf32>
    %49 = vector.extract_strided_slice %48 {offsets = [0, 0, 0, 0], sizes = [2, 4, 16, 16], strides = [1, 1, 1, 1]} : vector<2x4x16x16xf32> to vector<2x4x16x16xf32>
    %50 = tpu.iota {dimensions = array<i32: 2>} : vector<2x4x16x16xi32>
    %c1_i32_16 = arith.constant 1 : i32
    %51 = vector.broadcast %c1_i32_16 : i32 to vector<2x4x16x16xi32>
    %52 = arith.muli %50, %51 : vector<2x4x16x16xi32>
    %c1_i32_17 = arith.constant 1 : i32
    %53 = vector.broadcast %c1_i32_17 : i32 to vector<2x4x16x16xi32>
    %54 = arith.addi %52, %53 : vector<2x4x16x16xi32>
    %c0_i32_18 = arith.constant 0 : i32
    %55 = vector.broadcast %c0_i32_18 : i32 to vector<2x4x16x16xi32>
    %56 = arith.cmpi sge, %54, %55 : vector<2x4x16x16xi32>
    %c16_i32_19 = arith.constant 16 : i32
    %57 = vector.broadcast %c16_i32_19 : i32 to vector<2x4x16x16xi32>
    %58 = arith.cmpi slt, %54, %57 : vector<2x4x16x16xi32>
    %59 = arith.andi %56, %58 : vector<2x4x16x16xi1>
    %cst_20 = arith.constant 0.000000e+00 : f32
    %60 = vector.broadcast %cst_20 : f32 to vector<2x4x16x16xf32>
    %61 = arith.select %59, %49, %60 : vector<2x4x16x16xi1>, vector<2x4x16x16xf32>
    %62 = arith.addf %47, %61 : vector<2x4x16x16xf32>
    %63 = tpu.iota {dimensions = array<i32: 0>} : vector<16x16xi32>
    %64 = tpu.iota {dimensions = array<i32: 1>} : vector<16x16xi32>
    %c1_i32_21 = arith.constant 1 : i32
    %65 = vector.broadcast %c1_i32_21 : i32 to vector<16x16xi32>
    %66 = arith.muli %63, %65 : vector<16x16xi32>
    %c1_i32_22 = arith.constant 1 : i32
    %67 = vector.broadcast %c1_i32_22 : i32 to vector<16x16xi32>
    %68 = arith.subi %66, %67 : vector<16x16xi32>
    %c3_i32 = arith.constant 3 : i32
    %69 = vector.broadcast %c3_i32 : i32 to vector<16x16xi32>
    %70 = arith.addi %68, %69 : vector<16x16xi32>
    %c16_i32_23 = arith.constant 16 : i32
    %71 = vector.broadcast %c16_i32_23 : i32 to vector<16x16xi32>
    %72 = arith.minsi %70, %71 : vector<16x16xi32>
    %c1_i32_24 = arith.constant 1 : i32
    %73 = vector.broadcast %c1_i32_24 : i32 to vector<16x16xi32>
    %74 = arith.muli %63, %73 : vector<16x16xi32>
    %c1_i32_25 = arith.constant 1 : i32
    %75 = vector.broadcast %c1_i32_25 : i32 to vector<16x16xi32>
    %76 = arith.subi %74, %75 : vector<16x16xi32>
    %c0_i32_26 = arith.constant 0 : i32
    %77 = vector.broadcast %c0_i32_26 : i32 to vector<16x16xi32>
    %78 = arith.maxsi %76, %77 : vector<16x16xi32>
    %79 = arith.subi %72, %78 : vector<16x16xi32>
    %c1_i32_27 = arith.constant 1 : i32
    %80 = vector.broadcast %c1_i32_27 : i32 to vector<16x16xi32>
    %81 = arith.muli %64, %80 : vector<16x16xi32>
    %c1_i32_28 = arith.constant 1 : i32
    %82 = vector.broadcast %c1_i32_28 : i32 to vector<16x16xi32>
    %83 = arith.subi %81, %82 : vector<16x16xi32>
    %c3_i32_29 = arith.constant 3 : i32
    %84 = vector.broadcast %c3_i32_29 : i32 to vector<16x16xi32>
    %85 = arith.addi %83, %84 : vector<16x16xi32>
    %c16_i32_30 = arith.constant 16 : i32
    %86 = vector.broadcast %c16_i32_30 : i32 to vector<16x16xi32>
    %87 = arith.minsi %85, %86 : vector<16x16xi32>
    %c1_i32_31 = arith.constant 1 : i32
    %88 = vector.broadcast %c1_i32_31 : i32 to vector<16x16xi32>
    %89 = arith.muli %64, %88 : vector<16x16xi32>
    %c1_i32_32 = arith.constant 1 : i32
    %90 = vector.broadcast %c1_i32_32 : i32 to vector<16x16xi32>
    %91 = arith.subi %89, %90 : vector<16x16xi32>
    %c0_i32_33 = arith.constant 0 : i32
    %92 = vector.broadcast %c0_i32_33 : i32 to vector<16x16xi32>
    %93 = arith.maxsi %91, %92 : vector<16x16xi32>
    %94 = arith.subi %87, %93 : vector<16x16xi32>
    %95 = arith.muli %79, %94 : vector<16x16xi32>
    %96 = arith.sitofp %95 : vector<16x16xi32> to vector<16x16xf32>
    %cst_34 = arith.constant 1.000000e+00 : f32
    %97 = vector.broadcast %cst_34 : f32 to vector<16x16xf32>
    %98 = arith.divf %97, %96 : vector<16x16xf32>
    %99 = vector.shape_cast %98 : vector<16x16xf32> to vector<1x1x16x16xf32>
    %100 = vector.broadcast %99 : vector<1x1x16x16xf32> to vector<2x4x16x16xf32>
    %101 = arith.mulf %62, %100 : vector<2x4x16x16xf32>
    %cst_35 = arith.constant dense<0.000000e+00> : vector<2x4x16xf32>
    %102 = vector.multi_reduction <add>, %101, %cst_35 [3] : vector<2x4x16x16xf32> to vector<2x4x16xf32>
    %103 = vector.shape_cast %102 : vector<2x4x16xf32> to vector<2x4x16x1xf32>
    %cst_36 = arith.constant dense<0.000000e+00> : vector<2x4x1xf32>
    %104 = vector.multi_reduction <add>, %103, %cst_36 [2] : vector<2x4x16x1xf32> to vector<2x4x1xf32>
    %105 = vector.shape_cast %104 : vector<2x4x1xf32> to vector<2x4x1x1xf32>
    %cst_37 = arith.constant dense<0.000000e+00> : vector<4x1x1xf32>
    %106 = vector.multi_reduction <add>, %105, %cst_37 [0] : vector<2x4x1x1xf32> to vector<4x1x1xf32>
    %107 = vector.shape_cast %106 : vector<4x1x1xf32> to vector<1x4x1x1xf32>
    %cst_38 = arith.constant 0.001953125 : f32
    %108 = vector.broadcast %cst_38 : f32 to vector<1x4x1x1xf32>
    %109 = arith.mulf %107, %108 : vector<1x4x1x1xf32>
    %110 = vector.broadcast %109 : vector<1x4x1x1xf32> to vector<2x4x16x16xf32>
    %111 = arith.subf %101, %110 : vector<2x4x16x16xf32>
    %112 = arith.mulf %111, %111 : vector<2x4x16x16xf32>
    %cst_39 = arith.constant dense<0.000000e+00> : vector<2x4x16xf32>
    %113 = vector.multi_reduction <add>, %112, %cst_39 [3] : vector<2x4x16x16xf32> to vector<2x4x16xf32>
    %114 = vector.shape_cast %113 : vector<2x4x16xf32> to vector<2x4x16x1xf32>
    %cst_40 = arith.constant dense<0.000000e+00> : vector<2x4x1xf32>
    %115 = vector.multi_reduction <add>, %114, %cst_40 [2] : vector<2x4x16x1xf32> to vector<2x4x1xf32>
    %116 = vector.shape_cast %115 : vector<2x4x1xf32> to vector<2x4x1x1xf32>
    %cst_41 = arith.constant dense<0.000000e+00> : vector<4x1x1xf32>
    %117 = vector.multi_reduction <add>, %116, %cst_41 [0] : vector<2x4x1x1xf32> to vector<4x1x1xf32>
    %118 = vector.shape_cast %117 : vector<4x1x1xf32> to vector<1x4x1x1xf32>
    %cst_42 = arith.constant 0.001953125 : f32
    %119 = vector.broadcast %cst_42 : f32 to vector<1x4x1x1xf32>
    %120 = arith.mulf %118, %119 : vector<1x4x1x1xf32>
    %cst_43 = arith.constant 9.99999974E-6 : f32
    %121 = vector.broadcast %cst_43 : f32 to vector<1x4x1x1xf32>
    %122 = arith.addf %120, %121 : vector<1x4x1x1xf32>
    %123 = math.rsqrt %122 : vector<1x4x1x1xf32>
    %c0_44 = arith.constant 0 : index
    %c0_45 = arith.constant 0 : index
    %c0_46 = arith.constant 0 : index
    %c0_47 = arith.constant 0 : index
    %124 = vector.load %arg2[%c0_44, %c0_45, %c0_46, %c0_47] : memref<1x4x1x1xf32, #tpu.memory_space<vmem>>, vector<1x4x1x1xf32>
    %125 = arith.mulf %123, %124 : vector<1x4x1x1xf32>
    %126 = vector.broadcast %125 : vector<1x4x1x1xf32> to vector<2x4x16x16xf32>
    %127 = arith.mulf %111, %126 : vector<2x4x16x16xf32>
    %c0_48 = arith.constant 0 : index
    %c0_49 = arith.constant 0 : index
    %c0_50 = arith.constant 0 : index
    %c0_51 = arith.constant 0 : index
    %128 = vector.load %arg3[%c0_48, %c0_49, %c0_50, %c0_51] : memref<1x4x1x1xf32, #tpu.memory_space<vmem>>, vector<1x4x1x1xf32>
    %129 = vector.broadcast %128 : vector<1x4x1x1xf32> to vector<2x4x16x16xf32>
    %130 = arith.addf %127, %129 : vector<2x4x16x16xf32>
    %c0_52 = arith.constant 0 : index
    %c0_53 = arith.constant 0 : index
    %c0_54 = arith.constant 0 : index
    %c0_55 = arith.constant 0 : index
    %131 = vector.load %arg4[%c0_52, %c0_53, %c0_54, %c0_55] : memref<2x4x16x16xf32, #tpu.memory_space<vmem>>, vector<2x4x16x16xf32>
    tpu.vector_store %arg4[%c0_52, %c0_53, %c0_54, %c0_55], %130 {strides = array<i32>} : memref<2x4x16x16xf32, #tpu.memory_space<vmem>>, vector<2x4x16x16xf32>,
    return
  }
  func.func @transform_0(%arg0: i32) -> (i32, i32, i32, i32) {
    %c0_i32 = arith.constant 0 : i32
    %c0_i32_0 = arith.constant 0 : i32
    %c0_i32_1 = arith.constant 0 : i32
    %c0_i32_2 = arith.constant 0 : i32
    %c0_i32_3 = arith.constant 0 : i32
    return %c0_i32, %c0_i32_0, %c0_i32_1, %c0_i32_2 : i32, i32, i32, i32
  }
  func.func @transform_1(%arg0: i32) -> (i32, i32, i32, i32) {
    %c0_i32 = arith.constant 0 : i32
    %c0_i32_0 = arith.constant 0 : i32
    %c0_i32_1 = arith.constant 0 : i32
    %c0_i32_2 = arith.constant 0 : i32
    %c0_i32_3 = arith.constant 0 : i32
    return %c0_i32, %c0_i32_0, %c0_i32_1, %c0_i32_2 : i32, i32, i32, i32
  }
  func.func @transform_2(%arg0: i32) -> (i32, i32, i32, i32) {
    %c0_i32 = arith.constant 0 : i32
    %c0_i32_0 = arith.constant 0 : i32
    %c0_i32_1 = arith.constant 0 : i32
    %c0_i32_2 = arith.constant 0 : i32
    %c0_i32_3 = arith.constant 0 : i32
    return %c0_i32, %c0_i32_0, %c0_i32_1, %c0_i32_2 : i32, i32, i32, i32
  }
  func.func @transform_3(%arg0: i32) -> (i32, i32, i32, i32) {
    %c0_i32 = arith.constant 0 : i32
    %c0_i32_0 = arith.constant 0 : i32
    %c0_i32_1 = arith.constant 0 : i32
    %c0_i32_2 = arith.constant 0 : i32
    %c0_i32_3 = arith.constant 0 : i32
    return %c0_i32, %c0_i32_0, %c0_i32_1, %c0_i32_2 : i32, i32, i32, i32
  }
}

</mosaic_0001>

<llo_original>
// kernel: tpu_custom_call.1
$region0: #{tpu_custom_call.1}
  #allocation0 [shape = 'u32[]', space=smem, size = 0x4, offset = 0x4, fixed_abs, tag = 'smem constant byte address 0x4 - core index']
  #allocation1 [shape = 'u32[72,128]{1,0:T(1,128)}', space=vmem, size = 0x9000, scoped, tag = 'internal scratch']
  %s0 = inlined_call_operand.hbm [shape: f32[2,4,16,16], index: 0, kind: input, shape index: {}]
  %s1 = inlined_call_operand.vmem [shape: f32[1,4,1,1], index: 1, kind: input, shape index: {}]
  %s2 = inlined_call_operand.vmem [shape: f32[1,4,1,1], index: 2, kind: input, shape index: {}]
  %s3 = inlined_call_operand.hbm [shape: f32[2,4,16,16], index: 3, kind: output, shape index: {}]
  %s4 = sld [smem:[#allocation0]]
  $region26: #{tpu_custom_call.1} parent=0
    _
  %s6 = ssub.s32 1, %s4
  %s7 = scalar_select 0, %s6, %s4
  $region1: #{tpu_custom_call.1} parent=0
    #allocation2 [shape = 'u8[65536]{0}', space=vmem, size = 0x10000, scoped, tag = 'input window, operand 0, single buffered']
    #allocation3 [shape = 's32[1]{0}', space=sflag, size = 0x4, scoped, tag = 'scoped memory for tpu_custom_call.1']
    #allocation4 [shape = 's32[1]{0}', space=sflag, size = 0x4, scoped, tag = 'scoped memory for tpu_custom_call.1']
    #allocation5 [shape = 'u8[65536]{0}', space=vmem, size = 0x10000, scoped, tag = 'output window, operand 0, single buffered']
    %8 = vsyncpa [#allocation3], 0
    %9 = vsyncpa [#allocation4], 0
    // Predicated region
    $region2: #{tpu_custom_call.1} parent=1 // pred_check
      _
    $region3: #{tpu_custom_call.1} parent=1 // pred_check_branch
      %11 = sbr.rel (0) target = $region5
    $region4: #{tpu_custom_call.1} parent=1 // pred_region
      %13 = vsyncadd [#allocation3], 0
      %s14 = sshll.u32 %s0, 4
      %s15 = int_to_ptr.hbm [resolvable:$true] %s14
      %s16 = sshll.u32 [#allocation2], 4
      %s17 = int_to_ptr.vmem [resolvable:$true] %s16
      %22 = dma.hbm_to_vmem [thread:$0]  %s15, 2048, %s17, [#allocation3], 128, 128, 8
    $region5: #{tpu_custom_call.1} parent=1 // pred_fallthru
      _
    // Predicated region
    $region6: #{tpu_custom_call.1} parent=1 // pred_check
      _
    $region7: #{tpu_custom_call.1} parent=1 // pred_check_branch
      %24 = sbr.rel (0) target = $region9
    $region8: #{tpu_custom_call.1} parent=1 // pred_region
      _
    $region9: #{tpu_custom_call.1} parent=1 // pred_fallthru
      _
    // Predicated region
    $region10: #{tpu_custom_call.1} parent=1 // pred_check
      _
    $region11: #{tpu_custom_call.1} parent=1 // pred_check_branch
      %26 = sbr.rel (0) target = $region13
    $region12: #{tpu_custom_call.1} parent=1 // pred_region
      _
    $region13: #{tpu_custom_call.1} parent=1 // pred_fallthru
      _
    // Predicated region
    $region14: #{tpu_custom_call.1} parent=1 // pred_check
      _
    $region15: #{tpu_custom_call.1} parent=1 // pred_check_branch
      %28 = sbr.rel (0) target = $region17
    $region16: #{tpu_custom_call.1} parent=1 // pred_region
      %30 = dma.done [#allocation3], 2048
    $region17: #{tpu_custom_call.1} parent=1 // pred_fallthru
      _
    %v31 = vld [vmem:[#allocation2] sm:$0xff]
    %v32 = vld [vmem:[#allocation2 + $0x8] sm:$0xff]
    %v33 = vld [vmem:[#allocation2 + $0x10] sm:$0xff]
    %v34 = vld [vmem:[#allocation2 + $0x18] sm:$0xff]
    %v35 = vld [vmem:[#allocation2 + $0x20] sm:$0xff]
    %v36 = vld [vmem:[#allocation2 + $0x28] sm:$0xff]
    %v37 = vld [vmem:[#allocation2 + $0x30] sm:$0xff]
    %v38 = vld [vmem:[#allocation2 + $0x38] sm:$0xff]
    %v39 = vld [vmem:[#allocation2 + $0x40] sm:$0xff]
    %v40 = vld [vmem:[#allocation2 + $0x48] sm:$0xff]
    %v41 = vld [vmem:[#allocation2 + $0x50] sm:$0xff]
    %v42 = vld [vmem:[#allocation2 + $0x58] sm:$0xff]
    %v43 = vld [vmem:[#allocation2 + $0x60] sm:$0xff]
    %v44 = vld [vmem:[#allocation2 + $0x68] sm:$0xff]
    %v45 = vld [vmem:[#allocation2 + $0x70] sm:$0xff]
    %v46 = vld [vmem:[#allocation2 + $0x78] sm:$0xff]
    %vm47 = vcmask 1047680
    %48 = vrot.lane.b32.xlu0 %v31, 16
    %v49 = vpop.permute.xlu0 %48
    %v50 = vsel %vm47, %v49, %v31
    %51 = vrot.lane.b32.xlu0 %v32, 16
    %v52 = vpop.permute.xlu0 %51
    %v53 = vsel %vm47, %v52, %v32
    %54 = vrot.lane.b32.xlu0 %v33, 16
    %v55 = vpop.permute.xlu0 %54
    %v56 = vsel %vm47, %v55, %v33
    %57 = vrot.lane.b32.xlu0 %v34, 16
    %v58 = vpop.permute.xlu0 %57
    %v59 = vsel %vm47, %v58, %v34
    %60 = vrot.lane.b32.xlu0 %v35, 16
    %v61 = vpop.permute.xlu0 %60
    %v62 = vsel %vm47, %v61, %v35
    %63 = vrot.lane.b32.xlu0 %v36, 16
    %v64 = vpop.permute.xlu0 %63
    %v65 = vsel %vm47, %v64, %v36
    %66 = vrot.lane.b32.xlu0 %v37, 16
    %v67 = vpop.permute.xlu0 %66
    %v68 = vsel %vm47, %v67, %v37
    %69 = vrot.lane.b32.xlu0 %v38, 16
    %v70 = vpop.permute.xlu0 %69
    %v71 = vsel %vm47, %v70, %v38
    %72 = vrot.lane.b32.xlu0 %v39, 16
    %v73 = vpop.permute.xlu0 %72
    %v74 = vsel %vm47, %v73, %v39
    %75 = vrot.lane.b32.xlu0 %v40, 16
    %v76 = vpop.permute.xlu0 %75
    %v77 = vsel %vm47, %v76, %v40
    %78 = vrot.lane.b32.xlu0 %v41, 16
    %v79 = vpop.permute.xlu0 %78
    %v80 = vsel %vm47, %v79, %v41
    %81 = vrot.lane.b32.xlu0 %v42, 16
    %v82 = vpop.permute.xlu0 %81
    %v83 = vsel %vm47, %v82, %v42
    %84 = vrot.lane.b32.xlu0 %v43, 16
    %v85 = vpop.permute.xlu0 %84
    %v86 = vsel %vm47, %v85, %v43
    %87 = vrot.lane.b32.xlu0 %v44, 16
    %v88 = vpop.permute.xlu0 %87
    %v89 = vsel %vm47, %v88, %v44
    %90 = vrot.lane.b32.xlu0 %v45, 16
    %v91 = vpop.permute.xlu0 %90
    %v92 = vsel %vm47, %v91, %v45
    %93 = vrot.lane.b32.xlu0 %v46, 16
    %v94 = vpop.permute.xlu0 %93
    %v95 = vsel %vm47, %v94, %v46
    %96 = vrot.lane.b32.xlu0 %v50, 16
    %v97 = vpop.permute.xlu0 %96
    %98 = vrot.lane.b32.xlu0 %v53, 16
    %v99 = vpop.permute.xlu0 %98
    %100 = vrot.lane.b32.xlu0 %v56, 16
    %v101 = vpop.permute.xlu0 %100
    %102 = vrot.lane.b32.xlu0 %v59, 16
    %v103 = vpop.permute.xlu0 %102
    %104 = vrot.lane.b32.xlu0 %v62, 16
    %v105 = vpop.permute.xlu0 %104
    %106 = vrot.lane.b32.xlu0 %v65, 16
    %v107 = vpop.permute.xlu0 %106
    %108 = vrot.lane.b32.xlu0 %v68, 16
    %v109 = vpop.permute.xlu0 %108
    %110 = vrot.lane.b32.xlu0 %v71, 16
    %v111 = vpop.permute.xlu0 %110
    %112 = vrot.lane.b32.xlu0 %v74, 16
    %v113 = vpop.permute.xlu0 %112
    %114 = vrot.lane.b32.xlu0 %v77, 16
    %v115 = vpop.permute.xlu0 %114
    %116 = vrot.lane.b32.xlu0 %v80, 16
    %v117 = vpop.permute.xlu0 %116
    %118 = vrot.lane.b32.xlu0 %v83, 16
    %v119 = vpop.permute.xlu0 %118
    %120 = vrot.lane.b32.xlu0 %v86, 16
    %v121 = vpop.permute.xlu0 %120
    %122 = vrot.lane.b32.xlu0 %v89, 16
    %v123 = vpop.permute.xlu0 %122
    %124 = vrot.lane.b32.xlu0 %v92, 16
    %v125 = vpop.permute.xlu0 %124
    %126 = vrot.lane.b32.xlu0 %v95, 16
    %v127 = vpop.permute.xlu0 %126
    %v128 = vsel %vm47, %v97, %v31
    %v129 = vsel %vm47, %v99, %v32
    %v130 = vsel %vm47, %v101, %v33
    %v131 = vsel %vm47, %v103, %v34
    %v132 = vsel %vm47, %v105, %v35
    %v133 = vsel %vm47, %v107, %v36
    %v134 = vsel %vm47, %v109, %v37
    %v135 = vsel %vm47, %v111, %v38
    %v136 = vsel %vm47, %v113, %v39
    %v137 = vsel %vm47, %v115, %v40
    %v138 = vsel %vm47, %v117, %v41
    %v139 = vsel %vm47, %v119, %v42
    %v140 = vsel %vm47, %v121, %v43
    %v141 = vsel %vm47, %v123, %v44
    %v142 = vsel %vm47, %v125, %v45
    %v143 = vsel %vm47, %v127, %v46
    %v144 = vlaneseq
    %v145 = vand.u32 %v144, 127
    %v146 = vadd.s32 %v145, 4294967295
    %vm147 = vcmp.ge.s32.totalorder %v146, 0
    %vm148 = vcmp.lt.s32.totalorder %v146, 16
    %vm149 = vmand %vm147, %vm148
    %166 = vrot.lane.b32.xlu0 %v128, 113
    %v167 = vpop.permute.xlu0 %166
    %168 = vrot.lane.b32.xlu0 %v129, 113
    %v169 = vpop.permute.xlu0 %168
    %170 = vrot.lane.b32.xlu0 %v130, 113
    %v171 = vpop.permute.xlu0 %170
    %172 = vrot.lane.b32.xlu0 %v131, 113
    %v173 = vpop.permute.xlu0 %172
    %174 = vrot.lane.b32.xlu0 %v132, 113
    %v175 = vpop.permute.xlu0 %174
    %176 = vrot.lane.b32.xlu0 %v133, 113
    %v177 = vpop.permute.xlu0 %176
    %178 = vrot.lane.b32.xlu0 %v134, 113
    %v179 = vpop.permute.xlu0 %178
    %180 = vrot.lane.b32.xlu0 %v135, 113
    %v181 = vpop.permute.xlu0 %180
    %182 = vrot.lane.b32.xlu0 %v136, 113
    %v183 = vpop.permute.xlu0 %182
    %184 = vrot.lane.b32.xlu0 %v137, 113
    %v185 = vpop.permute.xlu0 %184
    %186 = vrot.lane.b32.xlu0 %v138, 113
    %v187 = vpop.permute.xlu0 %186
    %188 = vrot.lane.b32.xlu0 %v139, 113
    %v189 = vpop.permute.xlu0 %188
    %190 = vrot.lane.b32.xlu0 %v140, 113
    %v191 = vpop.permute.xlu0 %190
    %192 = vrot.lane.b32.xlu0 %v141, 113
    %v193 = vpop.permute.xlu0 %192
    %194 = vrot.lane.b32.xlu0 %v142, 113
    %v195 = vpop.permute.xlu0 %194
    %196 = vrot.lane.b32.xlu0 %v143, 113
    %v197 = vpop.permute.xlu0 %196
    %v214 = vsel %vm149, %v167, 0.0
    %v215 = vsel %vm149, %v169, 0.0
    %v216 = vsel %vm149, %v171, 0.0
    %v217 = vsel %vm149, %v173, 0.0
    %v218 = vsel %vm149, %v175, 0.0
    %v219 = vsel %vm149, %v177, 0.0
    %v220 = vsel %vm149, %v179, 0.0
    %v221 = vsel %vm149, %v181, 0.0
    %v222 = vsel %vm149, %v183, 0.0
    %v223 = vsel %vm149, %v185, 0.0
    %v224 = vsel %vm149, %v187, 0.0
    %v225 = vsel %vm149, %v189, 0.0
    %v226 = vsel %vm149, %v191, 0.0
    %v227 = vsel %vm149, %v193, 0.0
    %v228 = vsel %vm149, %v195, 0.0
    %v229 = vsel %vm149, %v197, 0.0
    %v230 = vadd.f32 %v214, %v31
    %v231 = vadd.f32 %v215, %v32
    %v232 = vadd.f32 %v216, %v33
    %v233 = vadd.f32 %v217, %v34
    %v234 = vadd.f32 %v218, %v35
    %v235 = vadd.f32 %v219, %v36
    %v236 = vadd.f32 %v220, %v37
    %v237 = vadd.f32 %v221, %v38
    %v238 = vadd.f32 %v222, %v39
    %v239 = vadd.f32 %v223, %v40
    %v240 = vadd.f32 %v224, %v41
    %v241 = vadd.f32 %v225, %v42
    %v242 = vadd.f32 %v226, %v43
    %v243 = vadd.f32 %v227, %v44
    %v244 = vadd.f32 %v228, %v45
    %v245 = vadd.f32 %v229, %v46
    %v246 = vadd.s32 %v145, 1
    %vm247 = vcmp.ge.s32.totalorder %v246, 0
    %vm248 = vcmp.lt.s32.totalorder %v246, 16
    %vm249 = vmand %vm247, %vm248
    %250 = vrot.lane.b32.xlu0 %v128, 127
    %v251 = vpop.permute.xlu0 %250
    %252 = vrot.lane.b32.xlu0 %v129, 127
    %v253 = vpop.permute.xlu0 %252
    %254 = vrot.lane.b32.xlu0 %v130, 127
    %v255 = vpop.permute.xlu0 %254
    %256 = vrot.lane.b32.xlu0 %v131, 127
    %v257 = vpop.permute.xlu0 %256
    %258 = vrot.lane.b32.xlu0 %v132, 127
    %v259 = vpop.permute.xlu0 %258
    %260 = vrot.lane.b32.xlu0 %v133, 127
    %v261 = vpop.permute.xlu0 %260
    %262 = vrot.lane.b32.xlu0 %v134, 127
    %v263 = vpop.permute.xlu0 %262
    %264 = vrot.lane.b32.xlu0 %v135, 127
    %v265 = vpop.permute.xlu0 %264
    %266 = vrot.lane.b32.xlu0 %v136, 127
    %v267 = vpop.permute.xlu0 %266
    %268 = vrot.lane.b32.xlu0 %v137, 127
    %v269 = vpop.permute.xlu0 %268
    %270 = vrot.lane.b32.xlu0 %v138, 127
    %v271 = vpop.permute.xlu0 %270
    %272 = vrot.lane.b32.xlu0 %v139, 127
    %v273 = vpop.permute.xlu0 %272
    %274 = vrot.lane.b32.xlu0 %v140, 127
    %v275 = vpop.permute.xlu0 %274
    %276 = vrot.lane.b32.xlu0 %v141, 127
    %v277 = vpop.permute.xlu0 %276
    %278 = vrot.lane.b32.xlu0 %v142, 127
    %v279 = vpop.permute.xlu0 %278
    %280 = vrot.lane.b32.xlu0 %v143, 127
    %v281 = vpop.permute.xlu0 %280
    %v298 = vsel %vm249, %v251, 0.0
    %v299 = vsel %vm249, %v253, 0.0
    %v300 = vsel %vm249, %v255, 0.0
    %v301 = vsel %vm249, %v257, 0.0
    %v302 = vsel %vm249, %v259, 0.0
    %v303 = vsel %vm249, %v261, 0.0
    %v304 = vsel %vm249, %v263, 0.0
    %v305 = vsel %vm249, %v265, 0.0
    %v306 = vsel %vm249, %v267, 0.0
    %v307 = vsel %vm249, %v269, 0.0
    %v308 = vsel %vm249, %v271, 0.0
    %v309 = vsel %vm249, %v273, 0.0
    %v310 = vsel %vm249, %v275, 0.0
    %v311 = vsel %vm249, %v277, 0.0
    %v312 = vsel %vm249, %v279, 0.0
    %v313 = vsel %vm249, %v281, 0.0
    %v314 = vadd.f32 %v230, %v298
    %v315 = vadd.f32 %v231, %v299
    %v316 = vadd.f32 %v232, %v300
    %v317 = vadd.f32 %v233, %v301
    %v318 = vadd.f32 %v234, %v302
    %v319 = vadd.f32 %v235, %v303
    %v320 = vadd.f32 %v236, %v304
    %v321 = vadd.f32 %v237, %v305
    %v322 = vadd.f32 %v238, %v306
    %v323 = vadd.f32 %v239, %v307
    %v324 = vadd.f32 %v240, %v308
    %v325 = vadd.f32 %v241, %v309
    %v326 = vadd.f32 %v242, %v310
    %v327 = vadd.f32 %v243, %v311
    %v328 = vadd.f32 %v244, %v312
    %v329 = vadd.f32 %v245, %v313
    %v330 = vrot.slane %v314, 7
    %v331 = vrot.slane %v316, 7
    %v332 = vrot.slane %v318, 7
    %v333 = vrot.slane %v320, 7
    %v334 = vrot.slane %v322, 7
    %v335 = vrot.slane %v324, 7
    %v336 = vrot.slane %v326, 7
    %v337 = vrot.slane %v328, 7
    %v338 = vrot.slane %v315, 7
    %v339 = vrot.slane %v317, 7
    %v340 = vrot.slane %v319, 7
    %v341 = vrot.slane %v321, 7
    %v342 = vrot.slane %v323, 7
    %v343 = vrot.slane %v325, 7
    %v344 = vrot.slane %v327, 7
    %v345 = vrot.slane %v329, 7
    %v346 = vlaneseq
    %v347 = vshrl.u32 %v346, 7
    %vm348 = vcmp.lt.s32.totalorder %v347, 1
    %v349 = vsel %vm348, %v330, %v338
    %v350 = vsel %vm348, %v331, %v339
    %v351 = vsel %vm348, %v332, %v340
    %v352 = vsel %vm348, %v333, %v341
    %v353 = vsel %vm348, %v334, %v342
    %v354 = vsel %vm348, %v335, %v343
    %v355 = vsel %vm348, %v336, %v344
    %v356 = vsel %vm348, %v337, %v345
    %v357 = vsel %vm348, %v338, %v330
    %v358 = vsel %vm348, %v339, %v331
    %v359 = vsel %vm348, %v340, %v332
    %v360 = vsel %vm348, %v341, %v333
    %v361 = vsel %vm348, %v342, %v334
    %v362 = vsel %vm348, %v343, %v335
    %v363 = vsel %vm348, %v344, %v336
    %v364 = vsel %vm348, %v345, %v337
    %v365 = vadd.s32 %v347, 8
    %v366 = vadd.s32 %v347, 4294967295
    %v367 = vadd.s32 %v365, 4294967295
    %vm368 = vcmp.ge.s32.totalorder %v366, 0
    %vm369 = vcmp.ge.s32.totalorder %v367, 0
    %vm370 = vcmp.lt.s32.totalorder %v366, 16
    %vm371 = vcmp.lt.s32.totalorder %v367, 16
    %vm372 = vmand %vm368, %vm370
    %vm373 = vmand %vm369, %vm371
    %v374 = vsel %vm372, %v357, 0.0
    %v375 = vsel %vm373, %v349, 0.0
    %v376 = vsel %vm372, %v358, 0.0
    %v377 = vsel %vm373, %v350, 0.0
    %v378 = vsel %vm372, %v359, 0.0
    %v379 = vsel %vm373, %v351, 0.0
    %v380 = vsel %vm372, %v360, 0.0
    %v381 = vsel %vm373, %v352, 0.0
    %v382 = vsel %vm372, %v361, 0.0
    %v383 = vsel %vm373, %v353, 0.0
    %v384 = vsel %vm372, %v362, 0.0
    %v385 = vsel %vm373, %v354, 0.0
    %v386 = vsel %vm372, %v363, 0.0
    %v387 = vsel %vm373, %v355, 0.0
    %v388 = vsel %vm372, %v364, 0.0
    %v389 = vsel %vm373, %v356, 0.0
    %v390 = vadd.f32 %v374, %v314
    %v391 = vadd.f32 %v375, %v315
    %v392 = vadd.f32 %v376, %v316
    %v393 = vadd.f32 %v377, %v317
    %v394 = vadd.f32 %v378, %v318
    %v395 = vadd.f32 %v379, %v319
    %v396 = vadd.f32 %v380, %v320
    %v397 = vadd.f32 %v381, %v321
    %v398 = vadd.f32 %v382, %v322
    %v399 = vadd.f32 %v383, %v323
    %v400 = vadd.f32 %v384, %v324
    %v401 = vadd.f32 %v385, %v325
    %v402 = vadd.f32 %v386, %v326
    %v403 = vadd.f32 %v387, %v327
    %v404 = vadd.f32 %v388, %v328
    %v405 = vadd.f32 %v389, %v329
    %v406 = vrot.slane %v314, 1
    %v407 = vrot.slane %v316, 1
    %v408 = vrot.slane %v318, 1
    %v409 = vrot.slane %v320, 1
    %v410 = vrot.slane %v322, 1
    %v411 = vrot.slane %v324, 1
    %v412 = vrot.slane %v326, 1
    %v413 = vrot.slane %v328, 1
    %v414 = vrot.slane %v315, 1
    %v415 = vrot.slane %v317, 1
    %v416 = vrot.slane %v319, 1
    %v417 = vrot.slane %v321, 1
    %v418 = vrot.slane %v323, 1
    %v419 = vrot.slane %v325, 1
    %v420 = vrot.slane %v327, 1
    %v421 = vrot.slane %v329, 1
    %vm422 = vcmp.lt.s32.totalorder %v347, 7
    %v423 = vsel %vm422, %v406, %v414
    %v424 = vsel %vm422, %v407, %v415
    %v425 = vsel %vm422, %v408, %v416
    %v426 = vsel %vm422, %v409, %v417
    %v427 = vsel %vm422, %v410, %v418
    %v428 = vsel %vm422, %v411, %v419
    %v429 = vsel %vm422, %v412, %v420
    %v430 = vsel %vm422, %v413, %v421
    %v431 = vsel %vm422, %v414, %v406
    %v432 = vsel %vm422, %v415, %v407
    %v433 = vsel %vm422, %v416, %v408
    %v434 = vsel %vm422, %v417, %v409
    %v435 = vsel %vm422, %v418, %v410
    %v436 = vsel %vm422, %v419, %v411
    %v437 = vsel %vm422, %v420, %v412
    %v438 = vsel %vm422, %v421, %v413
    %v439 = vadd.s32 %v347, 1
    %v440 = vadd.s32 %v365, 1
    %vm441 = vcmp.ge.s32.totalorder %v439, 0
    %vm442 = vcmp.ge.s32.totalorder %v440, 0
    %vm443 = vcmp.lt.s32.totalorder %v439, 16
    %vm444 = vcmp.lt.s32.totalorder %v440, 16
    %vm445 = vmand %vm441, %vm443
    %vm446 = vmand %vm442, %vm444
    %v447 = vsel %vm445, %v423, 0.0
    %v448 = vsel %vm446, %v431, 0.0
    %v449 = vsel %vm445, %v424, 0.0
    %v450 = vsel %vm446, %v432, 0.0
    %v451 = vsel %vm445, %v425, 0.0
    %v452 = vsel %vm446, %v433, 0.0
    %v453 = vsel %vm445, %v426, 0.0
    %v454 = vsel %vm446, %v434, 0.0
    %v455 = vsel %vm445, %v427, 0.0
    %v456 = vsel %vm446, %v435, 0.0
    %v457 = vsel %vm445, %v428, 0.0
    %v458 = vsel %vm446, %v436, 0.0
    %v459 = vsel %vm445, %v429, 0.0
    %v460 = vsel %vm446, %v437, 0.0
    %v461 = vsel %vm445, %v430, 0.0
    %v462 = vsel %vm446, %v438, 0.0
    %v463 = vadd.f32 %v390, %v447
    %v464 = vadd.f32 %v391, %v448
    %v465 = vadd.f32 %v392, %v449
    %v466 = vadd.f32 %v393, %v450
    %v467 = vadd.f32 %v394, %v451
    %v468 = vadd.f32 %v395, %v452
    %v469 = vadd.f32 %v396, %v453
    %v470 = vadd.f32 %v397, %v454
    %v471 = vadd.f32 %v398, %v455
    %v472 = vadd.f32 %v399, %v456
    %v473 = vadd.f32 %v400, %v457
    %v474 = vadd.f32 %v401, %v458
    %v475 = vadd.f32 %v402, %v459
    %v476 = vadd.f32 %v403, %v460
    %v477 = vadd.f32 %v404, %v461
    %v478 = vadd.f32 %v405, %v462
    %v479 = vsub.s32 %v347, 1
    %v480 = vsub.s32 %v365, 1
    %v481 = vadd.s32 %v479, 3
    %v482 = vadd.s32 %v480, 3
    %vm483 = vcmp.lt.s32.totalorder %v481, 16
    %v484 = vsel %vm483, %v481, 16
    %vm485 = vcmp.lt.s32.totalorder %v482, 16
    %v486 = vsel %vm485, %v482, 16
    %vm487 = vcmp.gt.s32.totalorder %v479, 0
    %v488 = vsel %vm487, %v479, 0
    %vm489 = vcmp.gt.s32.totalorder %v480, 0
    %v490 = vsel %vm489, %v480, 0
    %v491 = vsub.s32 %v484, %v488
    %v492 = vsub.s32 %v486, %v490
    %v493 = vsub.s32 %v145, 1
    %v494 = vadd.s32 %v493, 3
    %vm495 = vcmp.lt.s32.totalorder %v494, 16
    %v496 = vsel %vm495, %v494, 16
    %vm497 = vcmp.gt.s32.totalorder %v493, 0
    %v498 = vsel %vm497, %v493, 0
    %v499 = vsub.s32 %v496, %v498
    %v500 = vmul.u32 %v491, %v499
    %v501 = vmul.u32 %v492, %v499
    %v502 = vcvt.s32.f32 %v500
    %v503 = vcvt.s32.f32 %v501
    %v504 = vrcp.pop %v502
    %v505 = vmul.f32 %v502, %v504
    %v506 = vsub.f32 1.0, %v505
    %v507 = vmul.f32 %v504, %v506
    %v508 = vadd.f32 %v504, %v507
    %vm509 = vweird.f32 %v502
    %vm510 = vweird.f32 %v504
    %vm511 = vmor %vm509, %vm510
    %v512 = vsel %vm511, %v504, %v508
    %v513 = vand.u32 2147483647, %v502
    %vm514 = vcmp.eq.f32.partialorder %v513, 8.507059e+37
    %v515 = vand.u32 %v502, 2147483648
    %v516 = vor.u32 1.1754944e-38, %v515
    %v517 = vsel %vm514, %v516, %v512
    %v518 = vmul.f32 1.0, %v517
    %v519 = vrcp.pop %v503
    %v520 = vmul.f32 %v503, %v519
    %v521 = vsub.f32 1.0, %v520
    %v522 = vmul.f32 %v519, %v521
    %v523 = vadd.f32 %v519, %v522
    %vm524 = vweird.f32 %v503
    %vm525 = vweird.f32 %v519
    %vm526 = vmor %vm524, %vm525
    %v527 = vsel %vm526, %v519, %v523
    %v528 = vand.u32 2147483647, %v503
    %vm529 = vcmp.eq.f32.partialorder %v528, 8.507059e+37
    %v530 = vand.u32 %v503, 2147483648
    %v531 = vor.u32 1.1754944e-38, %v530
    %v532 = vsel %vm529, %v531, %v527
    %v533 = vmul.f32 1.0, %v532
    %v534 = vmul.f32 %v463, %v518
    %v535 = vmul.f32 %v464, %v533
    %v536 = vmul.f32 %v465, %v518
    %v537 = vmul.f32 %v466, %v533
    %v538 = vmul.f32 %v467, %v518
    %v539 = vmul.f32 %v468, %v533
    %v540 = vmul.f32 %v469, %v518
    %v541 = vmul.f32 %v470, %v533
    %v542 = vmul.f32 %v471, %v518
    %v543 = vmul.f32 %v472, %v533
    %v544 = vmul.f32 %v473, %v518
    %v545 = vmul.f32 %v474, %v533
    %v546 = vmul.f32 %v475, %v518
    %v547 = vmul.f32 %v476, %v533
    %v548 = vmul.f32 %v477, %v518
    %v549 = vmul.f32 %v478, %v533
    %vm550 = vcmask 130048
    %v551 = vsel %vm550, %v534, 0.0
    %552 = vadd.xlane.f32.xlu0 %v551
    %v553 = vpop.xlane.xlu0 %552
    %v554 = vsel %vm550, %v535, 0.0
    %555 = vadd.xlane.f32.xlu0 %v554
    %v556 = vpop.xlane.xlu0 %555
    %v557 = vsel %vm550, %v536, 0.0
    %558 = vadd.xlane.f32.xlu0 %v557
    %v559 = vpop.xlane.xlu0 %558
    %v560 = vsel %vm550, %v537, 0.0
    %561 = vadd.xlane.f32.xlu0 %v560
    %v562 = vpop.xlane.xlu0 %561
    %v563 = vsel %vm550, %v538, 0.0
    %564 = vadd.xlane.f32.xlu0 %v563
    %v565 = vpop.xlane.xlu0 %564
    %v566 = vsel %vm550, %v539, 0.0
    %567 = vadd.xlane.f32.xlu0 %v566
    %v568 = vpop.xlane.xlu0 %567
    %v569 = vsel %vm550, %v540, 0.0
    %570 = vadd.xlane.f32.xlu0 %v569
    %v571 = vpop.xlane.xlu0 %570
    %v572 = vsel %vm550, %v541, 0.0
    %573 = vadd.xlane.f32.xlu0 %v572
    %v574 = vpop.xlane.xlu0 %573
    %v575 = vsel %vm550, %v542, 0.0
    %576 = vadd.xlane.f32.xlu0 %v575
    %v577 = vpop.xlane.xlu0 %576
    %v578 = vsel %vm550, %v543, 0.0
    %579 = vadd.xlane.f32.xlu0 %v578
    %v580 = vpop.xlane.xlu0 %579
    %v581 = vsel %vm550, %v544, 0.0
    %582 = vadd.xlane.f32.xlu0 %v581
    %v583 = vpop.xlane.xlu0 %582
    %v584 = vsel %vm550, %v545, 0.0
    %585 = vadd.xlane.f32.xlu0 %v584
    %v586 = vpop.xlane.xlu0 %585
    %v587 = vsel %vm550, %v546, 0.0
    %588 = vadd.xlane.f32.xlu0 %v587
    %v589 = vpop.xlane.xlu0 %588
    %v590 = vsel %vm550, %v547, 0.0
    %591 = vadd.xlane.f32.xlu0 %v590
    %v592 = vpop.xlane.xlu0 %591
    %v593 = vsel %vm550, %v548, 0.0
    %594 = vadd.xlane.f32.xlu0 %v593
    %v595 = vpop.xlane.xlu0 %594
    %v596 = vsel %vm550, %v549, 0.0
    %597 = vadd.xlane.f32.xlu0 %v596
    %v598 = vpop.xlane.xlu0 %597
    %v599 = vadd.f32 %v553, %v556
    %v600 = vrot.slane %v599, 4
    %v601 = vadd.f32 %v599, %v600
    %v602 = vrot.slane %v601, 2
    %v603 = vadd.f32 %v601, %v602
    %v604 = vrot.slane %v603, 1
    %v605 = vadd.f32 %v603, %v604
    %v606 = vadd.f32 %v559, %v562
    %v607 = vrot.slane %v606, 4
    %v608 = vadd.f32 %v606, %v607
    %v609 = vrot.slane %v608, 2
    %v610 = vadd.f32 %v608, %v609
    %v611 = vrot.slane %v610, 1
    %v612 = vadd.f32 %v610, %v611
    %v613 = vadd.f32 %v565, %v568
    %v614 = vrot.slane %v613, 4
    %v615 = vadd.f32 %v613, %v614
    %v616 = vrot.slane %v615, 2
    %v617 = vadd.f32 %v615, %v616
    %v618 = vrot.slane %v617, 1
    %v619 = vadd.f32 %v617, %v618
    %v620 = vadd.f32 %v571, %v574
    %v621 = vrot.slane %v620, 4
    %v622 = vadd.f32 %v620, %v621
    %v623 = vrot.slane %v622, 2
    %v624 = vadd.f32 %v622, %v623
    %v625 = vrot.slane %v624, 1
    %v626 = vadd.f32 %v624, %v625
    %v627 = vadd.f32 %v577, %v580
    %v628 = vrot.slane %v627, 4
    %v629 = vadd.f32 %v627, %v628
    %v630 = vrot.slane %v629, 2
    %v631 = vadd.f32 %v629, %v630
    %v632 = vrot.slane %v631, 1
    %v633 = vadd.f32 %v631, %v632
    %v634 = vadd.f32 %v583, %v586
    %v635 = vrot.slane %v634, 4
    %v636 = vadd.f32 %v634, %v635
    %v637 = vrot.slane %v636, 2
    %v638 = vadd.f32 %v636, %v637
    %v639 = vrot.slane %v638, 1
    %v640 = vadd.f32 %v638, %v639
    %v641 = vadd.f32 %v589, %v592
    %v642 = vrot.slane %v641, 4
    %v643 = vadd.f32 %v641, %v642
    %v644 = vrot.slane %v643, 2
    %v645 = vadd.f32 %v643, %v644
    %v646 = vrot.slane %v645, 1
    %v647 = vadd.f32 %v645, %v646
    %v648 = vadd.f32 %v595, %v598
    %v649 = vrot.slane %v648, 4
    %v650 = vadd.f32 %v648, %v649
    %v651 = vrot.slane %v650, 2
    %v652 = vadd.f32 %v650, %v651
    %v653 = vrot.slane %v652, 1
    %v654 = vadd.f32 %v652, %v653
    %v655 = vadd.f32 %v605, %v633
    %v656 = vadd.f32 %v612, %v640
    %v657 = vadd.f32 %v619, %v647
    %v658 = vadd.f32 %v626, %v654
    %v659 = vmul.f32 %v655, 0.001953125
    %v660 = vmul.f32 %v656, 0.001953125
    %v661 = vmul.f32 %v657, 0.001953125
    %v662 = vmul.f32 %v658, 0.001953125
    %v663 = vsub.f32 %v534, %v659
    %v664 = vsub.f32 %v535, %v659
    %v665 = vsub.f32 %v536, %v660
    %v666 = vsub.f32 %v537, %v660
    %v667 = vsub.f32 %v538, %v661
    %v668 = vsub.f32 %v539, %v661
    %v669 = vsub.f32 %v540, %v662
    %v670 = vsub.f32 %v541, %v662
    %v671 = vsub.f32 %v542, %v659
    %v672 = vsub.f32 %v543, %v659
    %v673 = vsub.f32 %v544, %v660
    %v674 = vsub.f32 %v545, %v660
    %v675 = vsub.f32 %v546, %v661
    %v676 = vsub.f32 %v547, %v661
    %v677 = vsub.f32 %v548, %v662
    %v678 = vsub.f32 %v549, %v662
    %v679 = vmul.f32 %v663, %v663
    %v680 = vmul.f32 %v664, %v664
    %v681 = vmul.f32 %v665, %v665
    %v682 = vmul.f32 %v666, %v666
    %v683 = vmul.f32 %v667, %v667
    %v684 = vmul.f32 %v668, %v668
    %v685 = vmul.f32 %v669, %v669
    %v686 = vmul.f32 %v670, %v670
    %v687 = vmul.f32 %v671, %v671
    %v688 = vmul.f32 %v672, %v672
    %v689 = vmul.f32 %v673, %v673
    %v690 = vmul.f32 %v674, %v674
    %v691 = vmul.f32 %v675, %v675
    %v692 = vmul.f32 %v676, %v676
    %v693 = vmul.f32 %v677, %v677
    %v694 = vmul.f32 %v678, %v678
    %v695 = vsel %vm550, %v679, 0.0
    %696 = vadd.xlane.f32.xlu0 %v695
    %v697 = vpop.xlane.xlu0 %696
    %v698 = vsel %vm550, %v680, 0.0
    %699 = vadd.xlane.f32.xlu0 %v698
    %v700 = vpop.xlane.xlu0 %699
    %v701 = vsel %vm550, %v681, 0.0
    %702 = vadd.xlane.f32.xlu0 %v701
    %v703 = vpop.xlane.xlu0 %702
    %v704 = vsel %vm550, %v682, 0.0
    %705 = vadd.xlane.f32.xlu0 %v704
    %v706 = vpop.xlane.xlu0 %705
    %v707 = vsel %vm550, %v683, 0.0
    %708 = vadd.xlane.f32.xlu0 %v707
    %v709 = vpop.xlane.xlu0 %708
    %v710 = vsel %vm550, %v684, 0.0
    %711 = vadd.xlane.f32.xlu0 %v710
    %v712 = vpop.xlane.xlu0 %711
    %v713 = vsel %vm550, %v685, 0.0
    %714 = vadd.xlane.f32.xlu0 %v713
    %v715 = vpop.xlane.xlu0 %714
    %v716 = vsel %vm550, %v686, 0.0
    %717 = vadd.xlane.f32.xlu0 %v716
    %v718 = vpop.xlane.xlu0 %717
    %v719 = vsel %vm550, %v687, 0.0
    %720 = vadd.xlane.f32.xlu0 %v719
    %v721 = vpop.xlane.xlu0 %720
    %v722 = vsel %vm550, %v688, 0.0
    %723 = vadd.xlane.f32.xlu0 %v722
    %v724 = vpop.xlane.xlu0 %723
    %v725 = vsel %vm550, %v689, 0.0
    %726 = vadd.xlane.f32.xlu0 %v725
    %v727 = vpop.xlane.xlu0 %726
    %v728 = vsel %vm550, %v690, 0.0
    %729 = vadd.xlane.f32.xlu0 %v728
    %v730 = vpop.xlane.xlu0 %729
    %v731 = vsel %vm550, %v691, 0.0
    %732 = vadd.xlane.f32.xlu0 %v731
    %v733 = vpop.xlane.xlu0 %732
    %v734 = vsel %vm550, %v692, 0.0
    %735 = vadd.xlane.f32.xlu0 %v734
    %v736 = vpop.xlane.xlu0 %735
    %v737 = vsel %vm550, %v693, 0.0
    %738 = vadd.xlane.f32.xlu0 %v737
    %v739 = vpop.xlane.xlu0 %738
    %v740 = vsel %vm550, %v694, 0.0
    %741 = vadd.xlane.f32.xlu0 %v740
    %v742 = vpop.xlane.xlu0 %741
    %v743 = vadd.f32 %v697, %v700
    %v744 = vrot.slane %v743, 4
    %v745 = vadd.f32 %v743, %v744
    %v746 = vrot.slane %v745, 2
    %v747 = vadd.f32 %v745, %v746
    %v748 = vrot.slane %v747, 1
    %v749 = vadd.f32 %v747, %v748
    %v750 = vadd.f32 %v703, %v706
    %v751 = vrot.slane %v750, 4
    %v752 = vadd.f32 %v750, %v751
    %v753 = vrot.slane %v752, 2
    %v754 = vadd.f32 %v752, %v753
    %v755 = vrot.slane %v754, 1
    %v756 = vadd.f32 %v754, %v755
    %v757 = vadd.f32 %v709, %v712
    %v758 = vrot.slane %v757, 4
    %v759 = vadd.f32 %v757, %v758
    %v760 = vrot.slane %v759, 2
    %v761 = vadd.f32 %v759, %v760
    %v762 = vrot.slane %v761, 1
    %v763 = vadd.f32 %v761, %v762
    %v764 = vadd.f32 %v715, %v718
    %v765 = vrot.slane %v764, 4
    %v766 = vadd.f32 %v764, %v765
    %v767 = vrot.slane %v766, 2
    %v768 = vadd.f32 %v766, %v767
    %v769 = vrot.slane %v768, 1
    %v770 = vadd.f32 %v768, %v769
    %v771 = vadd.f32 %v721, %v724
    %v772 = vrot.slane %v771, 4
    %v773 = vadd.f32 %v771, %v772
    %v774 = vrot.slane %v773, 2
    %v775 = vadd.f32 %v773, %v774
    %v776 = vrot.slane %v775, 1
    %v777 = vadd.f32 %v775, %v776
    %v778 = vadd.f32 %v727, %v730
    %v779 = vrot.slane %v778, 4
    %v780 = vadd.f32 %v778, %v779
    %v781 = vrot.slane %v780, 2
    %v782 = vadd.f32 %v780, %v781
    %v783 = vrot.slane %v782, 1
    %v784 = vadd.f32 %v782, %v783
    %v785 = vadd.f32 %v733, %v736
    %v786 = vrot.slane %v785, 4
    %v787 = vadd.f32 %v785, %v786
    %v788 = vrot.slane %v787, 2
    %v789 = vadd.f32 %v787, %v788
    %v790 = vrot.slane %v789, 1
    %v791 = vadd.f32 %v789, %v790
    %v792 = vadd.f32 %v739, %v742
    %v793 = vrot.slane %v792, 4
    %v794 = vadd.f32 %v792, %v793
    %v795 = vrot.slane %v794, 2
    %v796 = vadd.f32 %v794, %v795
    %v797 = vrot.slane %v796, 1
    %v798 = vadd.f32 %v796, %v797
    %v799 = vadd.f32 %v749, %v777
    %v800 = vadd.f32 %v756, %v784
    %v801 = vadd.f32 %v763, %v791
    %v802 = vadd.f32 %v770, %v798
    %v803 = vmul.f32 %v799, 0.001953125
    %v804 = vmul.f32 %v800, 0.001953125
    %v805 = vmul.f32 %v801, 0.001953125
    %v806 = vmul.f32 %v802, 0.001953125
    %v807 = vadd.f32 %v803, 1e-05
    %v808 = vadd.f32 %v804, 1e-05
    %v809 = vadd.f32 %v805, 1e-05
    %v810 = vadd.f32 %v806, 1e-05
    %v811 = vrsqrt.pop %v807
    %v812 = vmul.f32 %v811, %v807
    %v813 = vmul.f32 %v812, %v811
    %v814 = vmul.f32 0.5, %v813
    %v815 = vsub.f32 1.5, %v814
    %v816 = vmul.f32 %v811, %v815
    %vm817 = vweird.f32 %v807
    %vm818 = vweird.f32 %v811
    %vm819 = vmor %vm817, %vm818
    %v820 = vsel %vm819, %v811, %v816
    %v821 = vrsqrt.pop %v808
    %v822 = vmul.f32 %v821, %v808
    %v823 = vmul.f32 %v822, %v821
    %v824 = vmul.f32 0.5, %v823
    %v825 = vsub.f32 1.5, %v824
    %v826 = vmul.f32 %v821, %v825
    %vm827 = vweird.f32 %v808
    %vm828 = vweird.f32 %v821
    %vm829 = vmor %vm827, %vm828
    %v830 = vsel %vm829, %v821, %v826
    %v831 = vrsqrt.pop %v809
    %v832 = vmul.f32 %v831, %v809
    %v833 = vmul.f32 %v832, %v831
    %v834 = vmul.f32 0.5, %v833
    %v835 = vsub.f32 1.5, %v834
    %v836 = vmul.f32 %v831, %v835
    %vm837 = vweird.f32 %v809
    %vm838 = vweird.f32 %v831
    %vm839 = vmor %vm837, %vm838
    %v840 = vsel %vm839, %v831, %v836
    %v841 = vrsqrt.pop %v810
    %v842 = vmul.f32 %v841, %v810
    %v843 = vmul.f32 %v842, %v841
    %v844 = vmul.f32 0.5, %v843
    %v845 = vsub.f32 1.5, %v844
    %v846 = vmul.f32 %v841, %v845
    %vm847 = vweird.f32 %v810
    %vm848 = vweird.f32 %v841
    %vm849 = vmor %vm847, %vm848
    %v850 = vsel %vm849, %v841, %v846
    %v851 = vld [vmem:[%s1] sm:$0x1]
    %v852 = vld [vmem:[%s1 + $0x1] sm:$0x1]
    %v853 = vld [vmem:[%s1 + $0x2] sm:$0x1]
    %v854 = vld [vmem:[%s1 + $0x3] sm:$0x1]
    %v855 = vmul.f32 %v820, %v851
    %v856 = vmul.f32 %v830, %v852
    %v857 = vmul.f32 %v840, %v853
    %v858 = vmul.f32 %v850, %v854
    %v863 = vperm.slane %v855, 0
    %v864 = vperm.slane %v856, 0
    %v865 = vperm.slane %v857, 0
    %v866 = vperm.slane %v858, 0
    %867 = vset.pattern.permute.xlu0 0
    %868 = vperm.xlu0 %867, %v863
    %v869 = vpop.permute.xlu0 %868
    %871 = vset.pattern.permute.xlu0 0
    %872 = vperm.xlu0 %871, %v864
    %v873 = vpop.permute.xlu0 %872
    %875 = vset.pattern.permute.xlu0 0
    %876 = vperm.xlu0 %875, %v865
    %v877 = vpop.permute.xlu0 %876
    %879 = vset.pattern.permute.xlu0 0
    %880 = vperm.xlu0 %879, %v866
    %v881 = vpop.permute.xlu0 %880
    %v883 = vmul.f32 %v663, %v869
    %v884 = vmul.f32 %v664, %v869
    %v885 = vmul.f32 %v665, %v873
    %v886 = vmul.f32 %v666, %v873
    %v887 = vmul.f32 %v667, %v877
    %v888 = vmul.f32 %v668, %v877
    %v889 = vmul.f32 %v669, %v881
    %v890 = vmul.f32 %v670, %v881
    %v891 = vmul.f32 %v671, %v869
    %v892 = vmul.f32 %v672, %v869
    %v893 = vmul.f32 %v673, %v873
    %v894 = vmul.f32 %v674, %v873
    %v895 = vmul.f32 %v675, %v877
    %v896 = vmul.f32 %v676, %v877
    %v897 = vmul.f32 %v677, %v881
    %v898 = vmul.f32 %v678, %v881
    %v899 = vld [vmem:[%s2] sm:$0x1]
    %v900 = vld [vmem:[%s2 + $0x1] sm:$0x1]
    %v901 = vld [vmem:[%s2 + $0x2] sm:$0x1]
    %v902 = vld [vmem:[%s2 + $0x3] sm:$0x1]
    %v907 = vperm.slane %v899, 0
    %v908 = vperm.slane %v900, 0
    %v909 = vperm.slane %v901, 0
    %v910 = vperm.slane %v902, 0
    %911 = vset.pattern.permute.xlu0 0
    %912 = vperm.xlu0 %911, %v907
    %v913 = vpop.permute.xlu0 %912
    %915 = vset.pattern.permute.xlu0 0
    %916 = vperm.xlu0 %915, %v908
    %v917 = vpop.permute.xlu0 %916
    %919 = vset.pattern.permute.xlu0 0
    %920 = vperm.xlu0 %919, %v909
    %v921 = vpop.permute.xlu0 %920
    %923 = vset.pattern.permute.xlu0 0
    %924 = vperm.xlu0 %923, %v910
    %v925 = vpop.permute.xlu0 %924
    %v927 = vadd.f32 %v883, %v913
    %v928 = vadd.f32 %v884, %v913
    %v929 = vadd.f32 %v885, %v917
    %v930 = vadd.f32 %v886, %v917
    %v931 = vadd.f32 %v887, %v921
    %v932 = vadd.f32 %v888, %v921
    %v933 = vadd.f32 %v889, %v925
    %v934 = vadd.f32 %v890, %v925
    %v935 = vadd.f32 %v891, %v913
    %v936 = vadd.f32 %v892, %v913
    %v937 = vadd.f32 %v893, %v917
    %v938 = vadd.f32 %v894, %v917
    %v939 = vadd.f32 %v895, %v921
    %v940 = vadd.f32 %v896, %v921
    %v941 = vadd.f32 %v897, %v925
    %v942 = vadd.f32 %v898, %v925
    %943 = vst.msk [vmem:[#allocation5] sm:$0xff] %vm550, %v927
    %944 = vst.msk [vmem:[#allocation5 + $0x8] sm:$0xff] %vm550, %v928
    %945 = vst.msk [vmem:[#allocation5 + $0x10] sm:$0xff] %vm550, %v929
    %946 = vst.msk [vmem:[#allocation5 + $0x18] sm:$0xff] %vm550, %v930
    %947 = vst.msk [vmem:[#allocation5 + $0x20] sm:$0xff] %vm550, %v931
    %948 = vst.msk [vmem:[#allocation5 + $0x28] sm:$0xff] %vm550, %v932
    %949 = vst.msk [vmem:[#allocation5 + $0x30] sm:$0xff] %vm550, %v933
    %950 = vst.msk [vmem:[#allocation5 + $0x38] sm:$0xff] %vm550, %v934
    %951 = vst.msk [vmem:[#allocation5 + $0x40] sm:$0xff] %vm550, %v935
    %952 = vst.msk [vmem:[#allocation5 + $0x48] sm:$0xff] %vm550, %v936
    %953 = vst.msk [vmem:[#allocation5 + $0x50] sm:$0xff] %vm550, %v937
    %954 = vst.msk [vmem:[#allocation5 + $0x58] sm:$0xff] %vm550, %v938
    %955 = vst.msk [vmem:[#allocation5 + $0x60] sm:$0xff] %vm550, %v939
    %956 = vst.msk [vmem:[#allocation5 + $0x68] sm:$0xff] %vm550, %v940
    %957 = vst.msk [vmem:[#allocation5 + $0x70] sm:$0xff] %vm550, %v941
    %958 = vst.msk [vmem:[#allocation5 + $0x78] sm:$0xff] %vm550, %v942
    // Predicated region
    $region18: #{tpu_custom_call.1} parent=1 // pred_check
      _
    $region19: #{tpu_custom_call.1} parent=1 // pred_check_branch
      %960 = sbr.rel (0) target = $region21
    $region20: #{tpu_custom_call.1} parent=1 // pred_region
      %962 = vsyncadd [#allocation4], 0
      %s963 = sshll.u32 [#allocation5], 4
      %s964 = int_to_ptr.vmem [resolvable:$true] %s963
      %s965 = sshll.u32 %s3, 4
      %s966 = int_to_ptr.hbm [resolvable:$true] %s965
      %971 = dma.vmem_to_hbm [thread:$0]  %s964, 2048, %s966, [#allocation4], 128, 128, 8
    $region21: #{tpu_custom_call.1} parent=1 // pred_fallthru
      _
    // Predicated region
    $region22: #{tpu_custom_call.1} parent=1 // pred_check
      _
    $region23: #{tpu_custom_call.1} parent=1 // pred_check_branch
      %973 = sbr.rel (0) target = $region25
    $region24: #{tpu_custom_call.1} parent=1 // pred_region
      %975 = dma.done [#allocation4], 2048
    $region25: #{tpu_custom_call.1} parent=1 // pred_fallthru
      _
    %976 = vsyncpa [#allocation3], 1
    %977 = vsyncpa [#allocation4], 1

</llo_original>
